<compile_context>
chip_gen: v7x
topology: tpu7x:2x2x1
jax: 0.10.0
libtpu: 0.0.40
codegen_flags: <defaults>
</compile_context>

<pallas_src>
import functools

import jax
import jax.numpy as jnp
from jax import lax
from jax.experimental import pallas as pl
from jax.experimental.pallas import tpu as pltpu

LN_EPS = 1e-12


def _round_up(x, m):
    return (x + m - 1) // m * m


def _ln_epilogue(y, x, b, gamma, beta, o_ref):
    """bias + residual + LayerNorm(H, eps=1e-12), all in f32."""
    y = y + b + x                      # dense bias + residual add
    # Dropout: module runs in eval/inference mode -> identity.
    # TODO(synk): training-mode dropout (pltpu.prng_random_bits mask) not emitted.
    mean = jnp.mean(y, axis=-1, keepdims=True)
    centered = y - mean                # two-pass stats: cheap VPU work under MXU
    var = jnp.mean(centered * centered, axis=-1, keepdims=True)
    inv_std = lax.rsqrt(var + LN_EPS)
    scale = gamma * inv_std            # fold gamma into the rsqrt scale
    o_ref[...] = (centered * scale + beta).astype(o_ref.dtype)


def _fused_kernel(h_ref, x_ref, w_ref, b_ref, g_ref, bt_ref, o_ref, *, mm_dtype):
    # Whole-I matmul: cast operands to mm_dtype in-kernel (free under the MXU),
    # always accumulate in f32. For best MXU column utilization on v6e/v7x keep
    # H a multiple of 256 (H=128 only uses half the 256-wide MXU; optimal on v5e).
    y = jnp.dot(h_ref[...].astype(mm_dtype), w_ref[...].astype(mm_dtype),
                preferred_element_type=jnp.float32)
    _ln_epilogue(y, x_ref[...], b_ref[...], g_ref[...], bt_ref[...], o_ref)


def _ktiled_kernel(h_ref, x_ref, w_ref, b_ref, g_ref, bt_ref, o_ref, acc_ref,
                   *, mm_dtype):
    # K-tiled fallback when the full (I, H) weight slab does not fit the VMEM budget.
    k = pl.program_id(1)

    @pl.when(k == 0)
    def _():
        acc_ref[...] = jnp.zeros_like(acc_ref)

    acc_ref[...] += jnp.dot(h_ref[...].astype(mm_dtype), w_ref[...].astype(mm_dtype),
                            preferred_element_type=jnp.float32)

    @pl.when(k == pl.num_programs(1) - 1)
    def _():
        _ln_epilogue(acc_ref[...], x_ref[...], b_ref[...], g_ref[...], bt_ref[...],
                     o_ref)


@functools.partial(
    jax.jit, static_argnames=("tm", "use_bf16_matmul", "out_dtype", "force_nk"))
def bert_output(hidden_states, input_tensor, w, b, gamma, beta, *,
                tm=512, use_bf16_matmul=True, out_dtype=jnp.float32,
                force_nk=None):
    """hidden_states: [B, S, I]; input_tensor: [B, S, H] -> [B, S, H] out_dtype."""
    B, S, I = hidden_states.shape
    H = input_tensor.shape[-1]
    rows = B * S

    mm_dtype = jnp.bfloat16 if use_bf16_matmul else jnp.float32

    # No wrapper-side casts or pads (those are extra HBM round-trips of the
    # largest tensors); only free leading-dim reshapes.
    h2d = hidden_states.reshape(rows, I)
    x2d = input_tensor.reshape(rows, H)
    b2d = b.reshape(1, H)
    g2d = gamma.reshape(1, H)
    bt2d = beta.reshape(1, H)

    # ---- Row tile -----------------------------------------------------------
    # 16-aligned (bf16 sublane packing). Clamp so the grid has >=2 row tiles
    # whenever rows allow it (v7x has 2 TensorCores; a 1-step grid idles one).
    tm_eff = min(tm, _round_up(rows, 16))
    if rows > 16:
        tm_eff = min(tm_eff, _round_up((rows + 1) // 2, 16))
    tm_eff = max(16, tm_eff)
    ni = pl.cdiv(rows, tm_eff)   # partial last tile handled by Pallas boundary masking

    # ---- VMEM budget / K tile ------------------------------------------------
    bpe_h = jnp.dtype(hidden_states.dtype).itemsize
    bpe_w = jnp.dtype(w.dtype).itemsize
    bpe_x = jnp.dtype(input_tensor.dtype).itemsize
    bpe_o = jnp.dtype(out_dtype).itemsize

    try:
        vmem_cap = int(pltpu.get_tpu_info().vmem_capacity_bytes)
    except Exception:
        vmem_cap = 64 << 20          # conservative fallback: v7x per-TC VMEM

    budget = max(vmem_cap - (8 << 20), vmem_cap // 2)

    def footprint(tk, w_bufs):
        return (w_bufs * tk * H * bpe_w        # weight slab(s)
                + 2 * tm_eff * tk * bpe_h      # hidden_states tiles (double-buffered)
                + 2 * tm_eff * H * bpe_x       # residual tiles
                + 2 * tm_eff * H * bpe_o       # output tiles
                + tm_eff * H * 4               # f32 accumulator (K-tiled path)
                + 4 * tm_eff * H * 4           # f32 epilogue temporaries
                + 8 * H * 4)                   # bias / gamma / beta (resident)

    if force_nk is not None and I % force_nk == 0 and (I // force_nk) % 128 == 0:
        tk = I // force_nk                       # debug/test hook for the K-tiled path
    elif footprint(I, 1) <= budget or I % 128 != 0:
        tk = I
    else:
        tk = 128
        for cand in range(I - 128, 127, -128):   # largest 128-multiple divisor of I that fits
            if I % cand == 0 and footprint(cand, 2) <= budget:
                tk = cand
                break
    nk = I // tk if (tk > 0 and I % tk == 0) else 1
    if nk == 1:
        tk = I

    vmem_bytes = footprint(tk, 1 if nk == 1 else 2)
    vmem_limit = int(min(max(vmem_bytes + (4 << 20), 16 << 20), vmem_cap))

    # ---- Specs ---------------------------------------------------------------
    # Whole-array VMEM residency => single-buffered (no pipeline double buffer).
    vmem_full = pl.BlockSpec(memory_space=pltpu.MemorySpace.VMEM)

    if nk == 1:
        grid = (ni,)
        in_specs = [
            pl.BlockSpec((tm_eff, I), lambda i: (i, 0)),   # hidden_states tile
            pl.BlockSpec((tm_eff, H), lambda i: (i, 0)),   # residual tile
            vmem_full,                                     # dense weight, resident
            vmem_full, vmem_full, vmem_full,               # bias / gamma / beta
        ]
        out_specs = pl.BlockSpec((tm_eff, H), lambda i: (i, 0))
        scratch_shapes = []
        kernel = functools.partial(_fused_kernel, mm_dtype=mm_dtype)
        dims = ("parallel",)
    else:
        grid = (ni, nk)
        in_specs = [
            pl.BlockSpec((tm_eff, tk), lambda i, k: (i, k)),  # hidden_states K slab
            pl.BlockSpec((tm_eff, H), lambda i, k: (i, 0)),   # residual (not re-fetched over k)
            pl.BlockSpec((tk, H), lambda i, k: (k, 0)),       # weight K slab
            vmem_full, vmem_full, vmem_full,                  # bias / gamma / beta
        ]
        out_specs = pl.BlockSpec((tm_eff, H), lambda i, k: (i, 0))
        scratch_shapes = [pltpu.VMEM((tm_eff, H), jnp.float32)]
        kernel = functools.partial(_ktiled_kernel, mm_dtype=mm_dtype)
        dims = ("parallel", "arbitrary")

    out = pl.pallas_call(
        kernel,
        out_shape=jax.ShapeDtypeStruct((rows, H), out_dtype),
        grid_spec=pltpu.PrefetchScalarGridSpec(
            num_scalar_prefetch=0,
            grid=grid,
            in_specs=in_specs,
            out_specs=out_specs,
            scratch_shapes=scratch_shapes,
        ),
        compiler_params=pltpu.CompilerParams(
            dimension_semantics=dims,
            vmem_limit_bytes=vmem_limit,
        ),
    )(h2d, x2d, w, b2d, g2d, bt2d)

    return out.reshape(B, S, H)


def reference(hidden_states, input_tensor, w, b, gamma, beta):
    h = hidden_states.astype(jnp.float32)
    y = h @ w.astype(jnp.float32) + b.astype(jnp.float32)
    y = y + input_tensor.astype(jnp.float32)
    mean = jnp.mean(y, axis=-1, keepdims=True)
    var = jnp.mean((y - mean) ** 2, axis=-1, keepdims=True)
    yn = (y - mean) / jnp.sqrt(var + LN_EPS)
    return yn * gamma + beta


if __name__ == "__main__":
    # Small config: batch=2, seq=8, intermediate_size=256, hidden_size=128.
    B, S, I, H = 2, 8, 256, 128

    key = jax.random.PRNGKey(0)
    k_h, k_x, k_w, k_b, k_g, k_beta = jax.random.split(key, 6)

    hidden_states = jax.random.normal(k_h, (B, S, I), dtype=jnp.float32)
    input_tensor = jax.random.normal(k_x, (B, S, H), dtype=jnp.float32)

    # Deterministic "module" parameters (nn.Linear(I, H) + BertLayerNorm(H)).
    w = jax.random.normal(k_w, (I, H), dtype=jnp.float32) * (1.0 / I**0.5)
    b = jax.random.normal(k_b, (H,), dtype=jnp.float32) * 0.02
    gamma = jnp.ones((H,), dtype=jnp.float32) + 0.01 * jax.random.normal(
        k_g, (H,), dtype=jnp.float32)
    beta = 0.01 * jax.random.normal(k_beta, (H,), dtype=jnp.float32)

    ref = reference(hidden_states, input_tensor, w, b, gamma, beta)

    # 1) Exact path (f32 matmul): must match the PyTorch-style reference tightly.
    out_f32 = jax.block_until_ready(
        bert_output(hidden_states, input_tensor, w, b, gamma, beta,
                    use_bf16_matmul=False))
    assert out_f32.shape == (B, S, H)
    assert jnp.allclose(out_f32, ref, atol=1e-5, rtol=1e-5), "f32 path mismatch"

    # 2) Fast path (bf16 matmul operands, f32 accumulation + f32 LN epilogue).
    out_bf16 = jax.block_until_ready(
        bert_output(hidden_states, input_tensor, w, b, gamma, beta,
                    use_bf16_matmul=True))
    assert out_bf16.shape == (B, S, H)
    assert jnp.allclose(out_bf16, ref, atol=5e-2, rtol=5e-2), "bf16 path mismatch"

    # 3) K-tiled fallback (intermediate axis split into 2 'arbitrary' grid steps).
    out_kt = jax.block_until_ready(
        bert_output(hidden_states, input_tensor, w, b, gamma, beta,
                    use_bf16_matmul=False, force_nk=2))
    assert jnp.allclose(out_kt, ref, atol=5e-5, rtol=5e-5), "k-tiled path mismatch"

    # 4) Partial last row tile (rows not a multiple of the row tile) — exercises
    #    the pl.cdiv grid / masked boundary path that replaced jnp.pad + slice.
    B2, S2 = 2, 13
    hs2 = jax.random.normal(k_h, (B2, S2, I), dtype=jnp.float32)
    it2 = jax.random.normal(k_x, (B2, S2, H), dtype=jnp.float32)
    ref2 = reference(hs2, it2, w, b, gamma, beta)
    out2 = jax.block_until_ready(
        bert_output(hs2, it2, w, b, gamma, beta, use_bf16_matmul=False))
    assert out2.shape == (B2, S2, H)
    assert jnp.allclose(out2, ref2, atol=1e-5, rtol=1e-5), "partial-tile mismatch"

    print("KERNEL_OK")
</pallas_src>

<mosaic_0001>
module attributes {stable_mosaic.version = 11 : i64} {
  func.func @_fused_kernel(%arg0: i32, %arg1: memref<16x256xf32, #tpu.memory_space<vmem>>, %arg2: memref<16x128xf32, #tpu.memory_space<vmem>>, %arg3: memref<256x128xf32, #tpu.memory_space<vmem>>, %arg4: memref<1x128xf32, #tpu.memory_space<vmem>>, %arg5: memref<1x128xf32, #tpu.memory_space<vmem>>, %arg6: memref<1x128xf32, #tpu.memory_space<vmem>>, %arg7: memref<16x128xf32, #tpu.memory_space<vmem>>) attributes {dimension_semantics = [#tpu.dimension_semantics<parallel>], iteration_bounds = array<i64: 1>, scalar_prefetch = 0 : i64, scratch_operands = 0 : i64, tpu.core_type = #tpu.core_type<tc>, window_params = [{transform_indices = @transform_0, window_bounds = array<i64: 16, 256>}, {transform_indices = @transform_1, window_bounds = array<i64: 16, 128>}, {pipeline_mode = #tpu.pipeline_mode<synchronous>, transform_indices = @transform_2, window_bounds = array<i64: 256, 128>}, {pipeline_mode = #tpu.pipeline_mode<synchronous>, transform_indices = @transform_3, window_bounds = array<i64: 1, 128>}, {pipeline_mode = #tpu.pipeline_mode<synchronous>, transform_indices = @transform_4, window_bounds = array<i64: 1, 128>}, {pipeline_mode = #tpu.pipeline_mode<synchronous>, transform_indices = @transform_5, window_bounds = array<i64: 1, 128>}, {transform_indices = @transform_6, window_bounds = array<i64: 16, 128>}]} {
    %c0 = arith.constant 0 : index
    %c0_0 = arith.constant 0 : index
    %0 = vector.load %arg1[%c0, %c0_0] : memref<16x256xf32, #tpu.memory_space<vmem>>, vector<16x256xf32>
    %c0_1 = arith.constant 0 : index
    %c0_2 = arith.constant 0 : index
    %1 = vector.load %arg3[%c0_1, %c0_2] : memref<256x128xf32, #tpu.memory_space<vmem>>, vector<256x128xf32>
    %cst = arith.constant dense<0.000000e+00> : vector<16x128xf32>
    %2 = tpu.matmul %0, %1, %cst {dimension_numbers = #tpu.dot_dimension_numbers<[1], [0], [0], [1], [0, 0, 1, 1], [], []>} : vector<16x256xf32>, vector<256x128xf32>, vector<16x128xf32> -> vector<16x128xf32>
    %c0_3 = arith.constant 0 : index
    %c0_4 = arith.constant 0 : index
    %3 = vector.load %arg2[%c0_3, %c0_4] : memref<16x128xf32, #tpu.memory_space<vmem>>, vector<16x128xf32>
    %c0_5 = arith.constant 0 : index
    %c0_6 = arith.constant 0 : index
    %4 = vector.load %arg4[%c0_5, %c0_6] : memref<1x128xf32, #tpu.memory_space<vmem>>, vector<1x128xf32>
    %c0_7 = arith.constant 0 : index
    %c0_8 = arith.constant 0 : index
    %5 = vector.load %arg5[%c0_7, %c0_8] : memref<1x128xf32, #tpu.memory_space<vmem>>, vector<1x128xf32>
    %c0_9 = arith.constant 0 : index
    %c0_10 = arith.constant 0 : index
    %6 = vector.load %arg6[%c0_9, %c0_10] : memref<1x128xf32, #tpu.memory_space<vmem>>, vector<1x128xf32>
    %7 = vector.broadcast %4 : vector<1x128xf32> to vector<16x128xf32>
    %8 = arith.addf %2, %7 : vector<16x128xf32>
    %9 = arith.addf %8, %3 : vector<16x128xf32>
    %cst_11 = arith.constant dense<0.000000e+00> : vector<16xf32>
    %10 = vector.multi_reduction <add>, %9, %cst_11 [1] : vector<16x128xf32> to vector<16xf32>
    %11 = vector.shape_cast %10 : vector<16xf32> to vector<16x1xf32>
    %cst_12 = arith.constant 1.280000e+02 : f32
    %12 = vector.broadcast %cst_12 : f32 to vector<16x1xf32>
    %13 = arith.divf %11, %12 : vector<16x1xf32>
    %14 = vector.broadcast %13 : vector<16x1xf32> to vector<16x128xf32>
    %15 = arith.subf %9, %14 : vector<16x128xf32>
    %16 = arith.mulf %15, %15 : vector<16x128xf32>
    %cst_13 = arith.constant dense<0.000000e+00> : vector<16xf32>
    %17 = vector.multi_reduction <add>, %16, %cst_13 [1] : vector<16x128xf32> to vector<16xf32>
    %18 = vector.shape_cast %17 : vector<16xf32> to vector<16x1xf32>
    %cst_14 = arith.constant 1.280000e+02 : f32
    %19 = vector.broadcast %cst_14 : f32 to vector<16x1xf32>
    %20 = arith.divf %18, %19 : vector<16x1xf32>
    %cst_15 = arith.constant 9.99999996E-13 : f32
    %21 = vector.broadcast %cst_15 : f32 to vector<16x1xf32>
    %22 = arith.addf %20, %21 : vector<16x1xf32>
    %23 = math.rsqrt %22 : vector<16x1xf32>
    %24 = vector.broadcast %5 : vector<1x128xf32> to vector<16x128xf32>
    %25 = vector.broadcast %23 : vector<16x1xf32> to vector<16x128xf32>
    %26 = arith.mulf %24, %25 : vector<16x128xf32>
    %27 = arith.mulf %15, %26 : vector<16x128xf32>
    %28 = vector.broadcast %6 : vector<1x128xf32> to vector<16x128xf32>
    %29 = arith.addf %27, %28 : vector<16x128xf32>
    %c0_16 = arith.constant 0 : index
    %c0_17 = arith.constant 0 : index
    %30 = vector.load %arg7[%c0_16, %c0_17] : memref<16x128xf32, #tpu.memory_space<vmem>>, vector<16x128xf32>
    tpu.vector_store %arg7[%c0_16, %c0_17], %29 {strides = array<i32>} : memref<16x128xf32, #tpu.memory_space<vmem>>, vector<16x128xf32>,
    return
  }
  func.func @transform_0(%arg0: i32) -> (i32, i32) {
    %c0_i32 = arith.constant 0 : i32
    %c0_i32_0 = arith.constant 0 : i32
    return %arg0, %c0_i32 : i32, i32
  }
  func.func @transform_1(%arg0: i32) -> (i32, i32) {
    %c0_i32 = arith.constant 0 : i32
    %c0_i32_0 = arith.constant 0 : i32
    return %arg0, %c0_i32 : i32, i32
  }
  func.func @transform_2(%arg0: i32) -> (i32, i32) {
    %c0_i32 = arith.constant 0 : i32
    %c0_i32_0 = arith.constant 0 : i32
    %c0_i32_1 = arith.constant 0 : i32
    return %c0_i32, %c0_i32_0 : i32, i32
  }
  func.func @transform_3(%arg0: i32) -> (i32, i32) {
    %c0_i32 = arith.constant 0 : i32
    %c0_i32_0 = arith.constant 0 : i32
    %c0_i32_1 = arith.constant 0 : i32
    return %c0_i32, %c0_i32_0 : i32, i32
  }
  func.func @transform_4(%arg0: i32) -> (i32, i32) {
    %c0_i32 = arith.constant 0 : i32
    %c0_i32_0 = arith.constant 0 : i32
    %c0_i32_1 = arith.constant 0 : i32
    return %c0_i32, %c0_i32_0 : i32, i32
  }
  func.func @transform_5(%arg0: i32) -> (i32, i32) {
    %c0_i32 = arith.constant 0 : i32
    %c0_i32_0 = arith.constant 0 : i32
    %c0_i32_1 = arith.constant 0 : i32
    return %c0_i32, %c0_i32_0 : i32, i32
  }
  func.func @transform_6(%arg0: i32) -> (i32, i32) {
    %c0_i32 = arith.constant 0 : i32
    %c0_i32_0 = arith.constant 0 : i32
    return %arg0, %c0_i32 : i32, i32
  }
}

</mosaic_0001>

<llo_original>
// kernel: bert_output.1
$region0: #{bert_output.1}
  #allocation0 [shape = 'u32[]', space=smem, size = 0x4, offset = 0x4, fixed_abs, tag = 'smem constant byte address 0x4 - core index']
  #allocation1 [shape = 'u32[144,128]{1,0:T(1,128)}', space=vmem, size = 0x12000, scoped, tag = 'internal scratch']
  %s0 = inlined_call_operand.hbm [shape: f32[16,256], index: 0, kind: input, shape index: {}]
  %s1 = inlined_call_operand.vmem [shape: f32[16,128], index: 1, kind: input, shape index: {}]
  %s2 = inlined_call_operand.hbm [shape: f32[256,128], index: 2, kind: input, shape index: {}]
  %s3 = inlined_call_operand.vmem [shape: f32[1,128], index: 3, kind: input, shape index: {}]
  %s4 = inlined_call_operand.vmem [shape: f32[1,128], index: 4, kind: input, shape index: {}]
  %s5 = inlined_call_operand.vmem [shape: f32[1,128], index: 5, kind: input, shape index: {}]
  %s6 = inlined_call_operand.hbm [shape: f32[16,128], index: 6, kind: output, shape index: {}]
  %s7 = sld [smem:[#allocation0]]
  $region42: #{bert_output.1} parent=0
    _
  %s9 = ssub.s32 1, %s7
  %s10 = scalar_select 0, %s9, %s7
  $region1: #{bert_output.1} parent=0
    #allocation2 [shape = 'u8[16384]{0}', space=vmem, size = 0x4000, scoped, tag = 'input window, operand 0, single buffered']
    #allocation3 [shape = 's32[1]{0}', space=sflag, size = 0x4, scoped, tag = 'scoped memory for bert_output.1']
    #allocation4 [shape = 's32[1]{0}', space=sflag, size = 0x4, scoped, tag = 'scoped memory for bert_output.1']
    #allocation5 [shape = 'u8[131072]{0}', space=vmem, size = 0x20000, scoped, tag = 'input window, operand 2, single buffered']
    #allocation6 [shape = 's32[1]{0}', space=sflag, size = 0x4, scoped, tag = 'scoped memory for bert_output.1']
    #allocation7 [shape = 'u8[8192]{0}', space=vmem, size = 0x2000, scoped, tag = 'output window, operand 0, single buffered']
    %11 = vsyncpa [#allocation3], 0
    %12 = vsyncpa [#allocation6], 0
    %13 = vsyncpa [#allocation4], 0
    // Predicated region
    $region2: #{bert_output.1} parent=1 // pred_check
      _
    $region3: #{bert_output.1} parent=1 // pred_check_branch
      %15 = sbr.rel (0) target = $region5
    $region4: #{bert_output.1} parent=1 // pred_region
      %s17 = ssub.s32 512, 512
      %18 = vsyncadd [#allocation3], %s17
      %s19 = sshll.u32 [#allocation2], 4
      %s20 = int_to_ptr.vmem [resolvable:$true] %s19
      %25 = dma.hbm_to_vmem [thread:$0]  %s0, 512, %s20, [#allocation3], 256, 256, 16
    $region5: #{bert_output.1} parent=1 // pred_fallthru
      _
    // Predicated region
    $region6: #{bert_output.1} parent=1 // pred_check
      _
    $region7: #{bert_output.1} parent=1 // pred_check_branch
      %27 = sbr.rel (0) target = $region9
    $region8: #{bert_output.1} parent=1 // pred_region
      _
    $region9: #{bert_output.1} parent=1 // pred_fallthru
      _
    // Predicated region
    $region10: #{bert_output.1} parent=1 // pred_check
      _
    $region11: #{bert_output.1} parent=1 // pred_check_branch
      %29 = sbr.rel (0) target = $region13
    $region12: #{bert_output.1} parent=1 // pred_region
      %s31 = ssub.s32 4096, 4096
      %32 = vsyncadd [#allocation6], %s31
      %s33 = sshll.u32 [#allocation5], 4
      %s34 = int_to_ptr.vmem [resolvable:$true] %s33
      %39 = dma.hbm_to_vmem [thread:$0]  %s2, 4096, %s34, [#allocation6], 128, 128, 8
    $region13: #{bert_output.1} parent=1 // pred_fallthru
      _
    // Predicated region
    $region14: #{bert_output.1} parent=1 // pred_check
      _
    $region15: #{bert_output.1} parent=1 // pred_check_branch
      %41 = sbr.rel (0) target = $region17
    $region16: #{bert_output.1} parent=1 // pred_region
      _
    $region17: #{bert_output.1} parent=1 // pred_fallthru
      _
    // Predicated region
    $region18: #{bert_output.1} parent=1 // pred_check
      _
    $region19: #{bert_output.1} parent=1 // pred_check_branch
      %43 = sbr.rel (0) target = $region21
    $region20: #{bert_output.1} parent=1 // pred_region
      _
    $region21: #{bert_output.1} parent=1 // pred_fallthru
      _
    // Predicated region
    $region22: #{bert_output.1} parent=1 // pred_check
      _
    $region23: #{bert_output.1} parent=1 // pred_check_branch
      %45 = sbr.rel (0) target = $region25
    $region24: #{bert_output.1} parent=1 // pred_region
      _
    $region25: #{bert_output.1} parent=1 // pred_fallthru
      _
    // Predicated region
    $region26: #{bert_output.1} parent=1 // pred_check
      _
    $region27: #{bert_output.1} parent=1 // pred_check_branch
      %47 = sbr.rel (0) target = $region29
    $region28: #{bert_output.1} parent=1 // pred_region
      %48 = dma.done [#allocation3], 512
    $region29: #{bert_output.1} parent=1 // pred_fallthru
      _
    // Predicated region
    $region30: #{bert_output.1} parent=1 // pred_check
      _
    $region31: #{bert_output.1} parent=1 // pred_check_branch
      %50 = sbr.rel (0) target = $region33
    $region32: #{bert_output.1} parent=1 // pred_region
      %51 = dma.done [#allocation6], 4096
    $region33: #{bert_output.1} parent=1 // pred_fallthru
      _
    %v52 = vld [vmem:[#allocation2] sm:$0xff]
    %v53 = vld [vmem:[#allocation2 + $0x8] sm:$0xff]
    %v54 = vld [vmem:[#allocation2 + $0x10] sm:$0xff]
    %v55 = vld [vmem:[#allocation2 + $0x18] sm:$0xff]
    %v56 = vld [vmem:[#allocation5] sm:$0xff]
    %v57 = vld [vmem:[#allocation5 + $0x8] sm:$0xff]
    %v58 = vld [vmem:[#allocation5 + $0x10] sm:$0xff]
    %v59 = vld [vmem:[#allocation5 + $0x18] sm:$0xff]
    %v60 = vld [vmem:[#allocation5 + $0x20] sm:$0xff]
    %v61 = vld [vmem:[#allocation5 + $0x28] sm:$0xff]
    %v62 = vld [vmem:[#allocation5 + $0x30] sm:$0xff]
    %v63 = vld [vmem:[#allocation5 + $0x38] sm:$0xff]
    %v64 = vld [vmem:[#allocation5 + $0x40] sm:$0xff]
    %v65 = vld [vmem:[#allocation5 + $0x48] sm:$0xff]
    %v66 = vld [vmem:[#allocation5 + $0x50] sm:$0xff]
    %v67 = vld [vmem:[#allocation5 + $0x58] sm:$0xff]
    %v68 = vld [vmem:[#allocation5 + $0x60] sm:$0xff]
    %v69 = vld [vmem:[#allocation5 + $0x68] sm:$0xff]
    %v70 = vld [vmem:[#allocation5 + $0x70] sm:$0xff]
    %v71 = vld [vmem:[#allocation5 + $0x78] sm:$0xff]
    %v72 = vld [vmem:[#allocation5 + $0x80] sm:$0xff]
    %v73 = vld [vmem:[#allocation5 + $0x88] sm:$0xff]
    %v74 = vld [vmem:[#allocation5 + $0x90] sm:$0xff]
    %v75 = vld [vmem:[#allocation5 + $0x98] sm:$0xff]
    %v76 = vld [vmem:[#allocation5 + $0xa0] sm:$0xff]
    %v77 = vld [vmem:[#allocation5 + $0xa8] sm:$0xff]
    %v78 = vld [vmem:[#allocation5 + $0xb0] sm:$0xff]
    %v79 = vld [vmem:[#allocation5 + $0xb8] sm:$0xff]
    %v80 = vld [vmem:[#allocation5 + $0xc0] sm:$0xff]
    %v81 = vld [vmem:[#allocation5 + $0xc8] sm:$0xff]
    %v82 = vld [vmem:[#allocation5 + $0xd0] sm:$0xff]
    %v83 = vld [vmem:[#allocation5 + $0xd8] sm:$0xff]
    %v84 = vld [vmem:[#allocation5 + $0xe0] sm:$0xff]
    %v85 = vld [vmem:[#allocation5 + $0xe8] sm:$0xff]
    %v86 = vld [vmem:[#allocation5 + $0xf0] sm:$0xff]
    %v87 = vld [vmem:[#allocation5 + $0xf8] sm:$0xff]
    %v88 = vld [vmem:[%s1] sm:$0xff]
    %v89 = vld [vmem:[%s1 + $0x8] sm:$0xff]
    %v90 = vld [vmem:[%s3] sm:$0x1]
    %v91 = vld [vmem:[%s4] sm:$0x1]
    %v92 = vld [vmem:[%s5] sm:$0x1]
    %v94 = vlaneseq
    %v95 = vshrl.u32 %v94, 7
    %v96 = vsub.s32 0, %v95
    %v97 = vrot.slane %v90, %v96
    %99 = vmatprep.subr.mxu0 0.0
    %100 = vmatpush1.msra.mxu0 %v56
    %101 = vmatprep.subr.mxu0 0.0
    %102 = vmatpush1.msra.mxu0 %v57
    %103 = vmatprep.subr.mxu0 0.0
    %104 = vmatpush1.msra.mxu0 %v58
    %105 = vmatprep.subr.mxu0 0.0
    %106 = vmatpush1.msra.mxu0 %v59
    %107 = vmatprep.subr.mxu0 0.0
    %108 = vmatpush1.msra.mxu0 %v60
    %109 = vmatprep.subr.mxu0 0.0
    %110 = vmatpush1.msra.mxu0 %v61
    %111 = vmatprep.subr.mxu0 0.0
    %112 = vmatpush1.msra.mxu0 %v62
    %113 = vmatprep.subr.mxu0 0.0
    %114 = vmatpush1.msra.mxu0 %v63
    %115 = vmatprep.subr.mxu0 0.0
    %116 = vmatpush1.msra.mxu0 %v64
    %117 = vmatprep.subr.mxu0 0.0
    %118 = vmatpush1.msra.mxu0 %v65
    %119 = vmatprep.subr.mxu0 0.0
    %120 = vmatpush1.msra.mxu0 %v66
    %121 = vmatprep.subr.mxu0 0.0
    %122 = vmatpush1.msra.mxu0 %v67
    %123 = vmatprep.subr.mxu0 0.0
    %124 = vmatpush1.msra.mxu0 %v68
    %125 = vmatprep.subr.mxu0 0.0
    %126 = vmatpush1.msra.mxu0 %v69
    %127 = vmatprep.subr.mxu0 0.0
    %128 = vmatpush1.msra.mxu0 %v70
    %129 = vmatprep.subr.mxu0 0.0
    %130 = vmatpush1.msra.mxu0 %v71
    %131 = vmatprep.subr.mxu0 0.0
    %132 = vmatpush1.msra.mxu0 %v72
    %133 = vmatprep.subr.mxu0 0.0
    %134 = vmatpush1.msra.mxu0 %v73
    %135 = vmatprep.subr.mxu0 0.0
    %136 = vmatpush1.msra.mxu0 %v74
    %137 = vmatprep.subr.mxu0 0.0
    %138 = vmatpush1.msra.mxu0 %v75
    %139 = vmatprep.subr.mxu0 0.0
    %140 = vmatpush1.msra.mxu0 %v76
    %141 = vmatprep.subr.mxu0 0.0
    %142 = vmatpush1.msra.mxu0 %v77
    %143 = vmatprep.subr.mxu0 0.0
    %144 = vmatpush1.msra.mxu0 %v78
    %145 = vmatprep.subr.mxu0 0.0
    %146 = vmatpush1.msra.mxu0 %v79
    %147 = vmatprep.subr.mxu0 0.0
    %148 = vmatpush1.msra.mxu0 %v80
    %149 = vmatprep.subr.mxu0 0.0
    %150 = vmatpush1.msra.mxu0 %v81
    %151 = vmatprep.subr.mxu0 0.0
    %152 = vmatpush1.msra.mxu0 %v82
    %153 = vmatprep.subr.mxu0 0.0
    %154 = vmatpush1.msra.mxu0 %v83
    %155 = vmatprep.subr.mxu0 0.0
    %156 = vmatpush1.msra.mxu0 %v84
    %157 = vmatprep.subr.mxu0 0.0
    %158 = vmatpush1.msra.mxu0 %v85
    %159 = vmatprep.subr.mxu0 0.0
    %160 = vmatpush1.msra.mxu0 %v86
    %161 = vmatprep.subr.mxu0 0.0
    %162 = vmatpush1.msra.mxu0 %v87
    %163 = vmatprep.mubr.f32.mxu0 %v53
    %164 = vmatmul.mubr.f32.gmra.mrb[0].mxu0 %v52
    %v165 = vpop.f32.mrb[0].mxu0
    %v166 = vadd.f32 %v97, %v165
    %v167 = vpop.f32.mrb[0].mxu0
    %168 = vmatprep.mubr.f32.mxu0 %v55
    %169 = vmatmul.mubr.f32.gmra.mrb[0].mxu0 %v54
    %v170 = vpop.f32.mrb[0].mxu0
    %v171 = vadd.f32 %v97, %v170
    %v172 = vpop.f32.mrb[0].mxu0
    %173 = vdwg.mxu0
    %v174 = vadd.f32 %v166, %v88
    %v175 = vadd.f32 %v171, %v89
    %176 = vadd.xlane.f32.xlu0 %v174
    %v177 = vpop.xlane.xlu0 %176
    %178 = vadd.xlane.f32.xlu0 %v175
    %v179 = vpop.xlane.xlu0 %178
    %v180 = vrcp.pop 128.0
    %v181 = vmul.f32 %v177, %v180
    %v182 = vmul.f32 %v179, %v180
    %v183 = vsub.f32 %v174, %v181
    %v184 = vsub.f32 %v175, %v182
    %v185 = vmul.f32 %v183, %v183
    %v186 = vmul.f32 %v184, %v184
    %187 = vadd.xlane.f32.xlu0 %v185
    %v188 = vpop.xlane.xlu0 %187
    %189 = vadd.xlane.f32.xlu0 %v186
    %v190 = vpop.xlane.xlu0 %189
    %v191 = vmul.f32 %v188, %v180
    %v192 = vmul.f32 %v190, %v180
    %v193 = vadd.f32 %v191, 1e-12
    %v194 = vadd.f32 %v192, 1e-12
    %v195 = vrsqrt.pop %v193
    %v196 = vrsqrt.pop %v194
    %v198 = vlaneseq
    %v199 = vshrl.u32 %v198, 7
    %v200 = vsub.s32 0, %v199
    %v201 = vrot.slane %v91, %v200
    %v203 = vmul.f32 %v201, %v195
    %v204 = vmul.f32 %v201, %v196
    %v205 = vmul.f32 %v183, %v203
    %v206 = vmul.f32 %v184, %v204
    %v208 = vlaneseq
    %v209 = vshrl.u32 %v208, 7
    %v210 = vsub.s32 0, %v209
    %v211 = vrot.slane %v92, %v210
    %v213 = vadd.f32 %v205, %v211
    %v214 = vadd.f32 %v206, %v211
    %215 = vst [vmem:[#allocation7] sm:$0xff] %v213
    %216 = vst [vmem:[#allocation7 + $0x8] sm:$0xff] %v214
    // Predicated region
    $region34: #{bert_output.1} parent=1 // pred_check
      _
    $region35: #{bert_output.1} parent=1 // pred_check_branch
      %218 = sbr.rel (0) target = $region37
    $region36: #{bert_output.1} parent=1 // pred_region
      %s220 = ssub.s32 256, 256
      %221 = vsyncadd [#allocation4], %s220
      %s222 = sshll.u32 [#allocation7], 4
      %s223 = int_to_ptr.vmem [resolvable:$true] %s222
      %228 = dma.vmem_to_hbm [thread:$0]  %s223, 256, %s6, [#allocation4], 128, 128, 8
    $region37: #{bert_output.1} parent=1 // pred_fallthru
      _
    // Predicated region
    $region38: #{bert_output.1} parent=1 // pred_check
      _
    $region39: #{bert_output.1} parent=1 // pred_check_branch
      %230 = sbr.rel (0) target = $region41
    $region40: #{bert_output.1} parent=1 // pred_region
      %231 = dma.done [#allocation4], 256
    $region41: #{bert_output.1} parent=1 // pred_fallthru
      _
    %232 = vsyncpa [#allocation3], 1
    %233 = vsyncpa [#allocation6], 1
    %234 = vsyncpa [#allocation4], 1

</llo_original>
